<compile_context>
chip_gen: v5e
topology: v5e:2x2
jax: 0.10.0
libtpu: 0.0.40
codegen_flags: <defaults>
</compile_context>

<pallas_src>
import functools

import numpy as np
import jax
import jax.numpy as jnp
from jax.experimental import pallas as pl
from jax.experimental.pallas import tpu as pltpu


def _ctc_greedy_kernel(em_ref, halo_ref, out_ref, *, blank: int, total_t: int):
    """One (TILE_T, L) time tile -> (TILE_T, 1) packed result (kept label idx or -1)."""
    e = em_ref[...]                                   # (TILE_T, L) float
    tile_t, L = e.shape

    # ---- argmax over labels (first occurrence of the max, matching torch.argmax) ----
    max_val = jnp.max(e, axis=-1, keepdims=True)                        # (TILE_T, 1)
    lane_ids = jax.lax.broadcasted_iota(jnp.int32, e.shape, 1)          # (TILE_T, L)
    cand = jnp.where(e == max_val, lane_ids, jnp.int32(L))
    idx = jnp.min(cand, axis=-1, keepdims=True).astype(jnp.int32)       # (TILE_T, 1)

    # ---- previous-row index for local row 0 from the halo block ----
    # Only the halo's last row (the previous tile's final timestep) is consumed, so only
    # that row is loaded/reduced (static ref slice: free).
    h_rows = halo_ref.shape[0]
    h = halo_ref[h_rows - 1:h_rows, :]                                  # (1, L)
    h_max = jnp.max(h, axis=-1, keepdims=True)
    h_ids = jax.lax.broadcasted_iota(jnp.int32, h.shape, 1)
    h_cand = jnp.where(h == h_max, h_ids, jnp.int32(L))
    prev_from_halo = jnp.min(h_cand, axis=-1, keepdims=True).astype(jnp.int32)  # (1, 1)

    # ---- unique_consecutive keep-mask ----
    prev = pltpu.roll(idx, shift=1, axis=0)                             # prev[i] = idx[i-1]
    row = jax.lax.broadcasted_iota(jnp.int32, idx.shape, 0)
    prev = jnp.where(row == 0, prev_from_halo, prev)                    # fix wrapped row 0

    is_first_tile = pl.program_id(0) == 0
    is_new_run = jnp.logical_or(idx != prev,
                                jnp.logical_and(row == 0, is_first_tile))

    # ---- drop blanks, mask the ragged/OOB tail of the last tile, merge into one int32 ----
    global_row = pl.program_id(0) * tile_t + row
    keep = jnp.logical_and(is_new_run, idx != jnp.int32(blank))
    keep = jnp.logical_and(keep, global_row < total_t)                  # in-kernel tail mask
    out_ref[...] = jnp.where(keep, idx, jnp.int32(-1))                  # (TILE_T, 1)


def _vmem_capacity_bytes() -> int:
    try:
        return int(pltpu.get_tpu_info().vmem_capacity_bytes)
    except Exception:
        return 64 << 20   # conservative fallback: v7x per-TensorCore physical VMEM


@functools.partial(jax.jit, static_argnames=("blank", "tile_t"))
def greedy_ctc_device(emission: jax.Array, *, blank: int = 0, tile_t: int = 512):
    """Runs the Pallas kernel on one utterance. emission: [T, L] float.

    Returns int32 of shape (num_tiles * TILE_T, 1): kept label index per step, or -1
    (slice to [:T] on the host).
    """
    T, L = emission.shape
    itemsize = emission.dtype.itemsize

    # --- tile sizing: lane-padded row bytes, dtype sublane packing, per-generation cap ---
    sub = max(8, 32 // itemsize)                  # 8 (f32) / 16 (bf16) / 32 (int8) rows
    lanes_padded = pl.cdiv(L, 128) * 128          # VMEM pads the minor dim to 128 lanes
    row_bytes = lanes_padded * itemsize

    vmem_cap = _vmem_capacity_bytes()
    # Per-buffer cap: double-buffered input + in-body temporaries must stay well inside
    # VMEM on every generation (v7x: 64 MiB physical per TC; v5e/v6e: 128 MiB).
    tile_bytes_cap = min(16 << 20, vmem_cap // 8)
    max_rows_by_vmem = max(sub, (tile_bytes_cap // row_bytes) // sub * sub)

    t_ceil = pl.cdiv(T, sub) * sub
    tt = min(tile_t, max_rows_by_vmem, t_ceil)
    if T >= 2 * sub:
        # >= 2 roughly balanced tiles: the carry-free "parallel" time axis then feeds both
        # v7x TensorCores (and bounds the ragged last tile); harmless on v5e/v6e (1 TC).
        half = pl.cdiv((T + 1) // 2, sub) * sub
        tt = min(tt, half)
    tt = max(sub, (tt // sub) * sub)

    num_tiles = pl.cdiv(T, tt)
    hb = tt // sub                                # halo BlockSpec uses `sub`-row blocks

    # Raise scoped VMEM to cover double-buffered blocks + argmax temporaries (+ slack).
    in_tile_bytes = tt * row_bytes
    halo_bytes = sub * row_bytes
    out_tile_bytes = tt * 128 * 4                 # (tt, 1) i32 column, lane-padded in VMEM
    need = 2 * (in_tile_bytes + halo_bytes + out_tile_bytes) + 2 * in_tile_bytes + (2 << 20)
    vmem_limit = int(min(max(need, 16 << 20), vmem_cap * 3 // 4))

    return pl.pallas_call(
        functools.partial(_ctc_greedy_kernel, blank=blank, total_t=T),
        out_shape=jax.ShapeDtypeStruct((num_tiles * tt, 1), jnp.int32),
        grid=(num_tiles,),
        in_specs=[
            # main (TILE_T, L) time tile; last tile may be ragged (OOB rows masked in-kernel)
            pl.BlockSpec((tt, L), lambda i: (i, 0)),
            # sub-row halo: last `sub` rows of the previous tile (clamped for tile 0)
            pl.BlockSpec((sub, L), lambda i: (jnp.maximum(i * hb - 1, 0), 0)),
        ],
        out_specs=pl.BlockSpec((tt, 1), lambda i: (i, 0)),
        compiler_params=pltpu.CompilerParams(
            dimension_semantics=("parallel",),    # carry-free -> shardable across v7x TCs
            vmem_limit_bytes=vmem_limit,
        ),
    )(emission, emission)


class GreedyCTCDecoder:
    """JAX/Pallas port of the PyTorch GreedyCTCDecoder module."""

    def __init__(self, labels, blank=0):
        self.labels = labels
        self.blank = blank
        self._label_arr = np.asarray(list(labels))

    def __call__(self, emission, *, tile_t: int = 512) -> str:
        # TODO(synk): the final label lookup + ''.join must stay on the host (a Python
        # `str` cannot be produced on-device); it is vectorized with numpy (no hot loop).
        emission = jnp.asarray(emission)
        T = emission.shape[0]
        packed = greedy_ctc_device(emission, blank=self.blank, tile_t=tile_t)
        packed = np.asarray(jax.block_until_ready(packed))[:T, 0]
        kept = packed[packed >= 0]
        return "".join(self._label_arr[kept].tolist())


def _reference_decode(emission_np: np.ndarray, labels, blank=0) -> str:
    indices = np.argmax(emission_np, axis=-1)
    dedup = [indices[0]] + [indices[t] for t in range(1, len(indices))
                            if indices[t] != indices[t - 1]]
    return "".join(labels[int(i)] for i in dedup if i != blank)


if __name__ == "__main__":
    labels = "-abcdefghijklmnopqrstuvwxyz01234"   # 32 labels, index 0 ('-') is the CTC blank
    L = len(labels)
    decoder = GreedyCTCDecoder(labels, blank=0)

    key = jax.random.PRNGKey(0)
    k1, k2, k3 = jax.random.split(key, 3)

    # 1) shape consistent with the module example: num_seq=8, num_label=32 (single tile)
    em1 = jax.random.normal(k1, (8, L), dtype=jnp.float32)
    out1 = decoder(em1)
    ref1 = _reference_decode(np.array(em1), labels, blank=0)
    assert out1 == ref1, f"single-tile mismatch: kernel={out1!r} ref={ref1!r}"

    # 2) multi-tile: several grid steps, a ragged last tile (200 % 64 != 0, handled purely
    #    by the in-kernel tail mask -- no host padding), and cross-tile dedup through the
    #    halo (duplicate argmax rows straddling tile boundaries at tile_t=64).
    em2 = np.array(jax.random.normal(k2, (200, L), dtype=jnp.float32))
    em2[64] = em2[63]     # boundary between tile 0 and tile 1
    em2[128] = em2[127]   # boundary between tile 1 and tile 2
    em2 = jnp.asarray(em2)
    out2 = decoder(em2, tile_t=64)
    ref2 = _reference_decode(np.array(em2), labels, blank=0)
    assert out2 == ref2, f"multi-tile mismatch: kernel={out2!r} ref={ref2!r}"

    # 3) default tile_t with T=100: exercises the balanced 2-tile heuristic and the
    #    ragged/OOB-masked tail; the duplicate at rows 55/56 straddles the internal split.
    em3 = np.array(jax.random.normal(k3, (100, L), dtype=jnp.float32))
    em3[56] = em3[55]
    em3 = jnp.asarray(em3)
    out3 = decoder(em3)
    ref3 = _reference_decode(np.array(em3), labels, blank=0)
    assert out3 == ref3, f"ragged-tail mismatch: kernel={out3!r} ref={ref3!r}"

    print("KERNEL_OK")
</pallas_src>

<mosaic_0001>
module attributes {stable_mosaic.version = 11 : i64} {
  func.func @_ctc_greedy_kernel(%arg0: i32, %arg1: memref<8x32xf32, #tpu.memory_space<vmem>>, %arg2: memref<8x32xf32, #tpu.memory_space<vmem>>, %arg3: memref<8x1xi32, #tpu.memory_space<vmem>>) attributes {dimension_semantics = [#tpu.dimension_semantics<parallel>], iteration_bounds = array<i64: 1>, scalar_prefetch = 0 : i64, scratch_operands = 0 : i64, tpu.core_type = #tpu.core_type<tc>, window_params = [{transform_indices = @transform_0, window_bounds = array<i64: 8, 32>}, {transform_indices = @transform_1, window_bounds = array<i64: 8, 32>}, {transform_indices = @transform_2, window_bounds = array<i64: 8, 1>}]} {
    %c0 = arith.constant 0 : index
    %c0_0 = arith.constant 0 : index
    %0 = vector.load %arg1[%c0, %c0_0] : memref<8x32xf32, #tpu.memory_space<vmem>>, vector<8x32xf32>
    %cst = arith.constant dense<0xFF800000> : vector<8xf32>
    %1 = vector.multi_reduction <maximumf>, %0, %cst [1] : vector<8x32xf32> to vector<8xf32>
    %2 = vector.shape_cast %1 : vector<8xf32> to vector<8x1xf32>
    %3 = tpu.iota {dimensions = array<i32: 1>} : vector<8x32xi32>
    %4 = vector.broadcast %2 : vector<8x1xf32> to vector<8x32xf32>
    %5 = arith.cmpf oeq, %0, %4 : vector<8x32xf32>
    %c32_i32 = arith.constant 32 : i32
    %6 = vector.broadcast %c32_i32 : i32 to vector<8x32xi32>
    %7 = arith.select %5, %3, %6 : vector<8x32xi1>, vector<8x32xi32>
    %cst_1 = arith.constant dense<2147483647> : vector<8xi32>
    %8 = vector.multi_reduction <minsi>, %7, %cst_1 [1] : vector<8x32xi32> to vector<8xi32>
    %9 = vector.shape_cast %8 : vector<8xi32> to vector<8x1xi32>
    %c7 = arith.constant 7 : index
    %c0_2 = arith.constant 0 : index
    %10 = vector.load %arg2[%c7, %c0_2] : memref<8x32xf32, #tpu.memory_space<vmem>>, vector<1x32xf32>
    %cst_3 = arith.constant dense<0xFF800000> : vector<1xf32>
    %11 = vector.multi_reduction <maximumf>, %10, %cst_3 [1] : vector<1x32xf32> to vector<1xf32>
    %12 = vector.shape_cast %11 : vector<1xf32> to vector<1x1xf32>
    %13 = tpu.iota {dimensions = array<i32: 1>} : vector<1x32xi32>
    %14 = vector.broadcast %12 : vector<1x1xf32> to vector<1x32xf32>
    %15 = arith.cmpf oeq, %10, %14 : vector<1x32xf32>
    %c32_i32_4 = arith.constant 32 : i32
    %16 = vector.broadcast %c32_i32_4 : i32 to vector<1x32xi32>
    %17 = arith.select %15, %13, %16 : vector<1x32xi1>, vector<1x32xi32>
    %cst_5 = arith.constant dense<2147483647> : vector<1xi32>
    %18 = vector.multi_reduction <minsi>, %17, %cst_5 [1] : vector<1x32xi32> to vector<1xi32>
    %19 = vector.shape_cast %18 : vector<1xi32> to vector<1x1xi32>
    %c1_i32 = arith.constant 1 : i32
    %20 = tpu.dynamic_rotate %9 by %c1_i32 dim 0 : vector<8x1xi32>, i32 -> vector<8x1xi32>
    %21 = tpu.iota {dimensions = array<i32: 0>} : vector<8x1xi32>
    %c0_i32 = arith.constant 0 : i32
    %22 = vector.broadcast %c0_i32 : i32 to vector<8x1xi32>
    %23 = arith.cmpi eq, %21, %22 : vector<8x1xi32>
    %24 = vector.shape_cast %19 : vector<1x1xi32> to vector<1x1xi32>
    %25 = vector.broadcast %24 : vector<1x1xi32> to vector<8x1xi32>
    %26 = arith.select %23, %25, %20 : vector<8x1xi1>, vector<8x1xi32>
    %c0_i32_6 = arith.constant 0 : i32
    %27 = arith.cmpi eq, %arg0, %c0_i32_6 : i32
    %28 = arith.cmpi ne, %9, %26 : vector<8x1xi32>
    %c0_i32_7 = arith.constant 0 : i32
    %29 = vector.broadcast %c0_i32_7 : i32 to vector<8x1xi32>
    %30 = arith.cmpi eq, %21, %29 : vector<8x1xi32>
    %31 = vector.broadcast %27 : i1 to vector<8x1xi1>
    %32 = arith.andi %30, %31 : vector<8x1xi1>
    %33 = arith.ori %28, %32 : vector<8x1xi1>
    %c8_i32 = arith.constant 8 : i32
    %34 = arith.muli %arg0, %c8_i32 : i32
    %35 = vector.broadcast %34 : i32 to vector<8x1xi32>
    %36 = arith.addi %35, %21 : vector<8x1xi32>
    %c0_i32_8 = arith.constant 0 : i32
    %37 = vector.broadcast %c0_i32_8 : i32 to vector<8x1xi32>
    %38 = arith.cmpi ne, %9, %37 : vector<8x1xi32>
    %39 = arith.andi %33, %38 : vector<8x1xi1>
    %c8_i32_9 = arith.constant 8 : i32
    %40 = vector.broadcast %c8_i32_9 : i32 to vector<8x1xi32>
    %41 = arith.cmpi slt, %36, %40 : vector<8x1xi32>
    %42 = arith.andi %39, %41 : vector<8x1xi1>
    %c-1_i32 = arith.constant -1 : i32
    %43 = vector.broadcast %c-1_i32 : i32 to vector<8x1xi32>
    %44 = arith.select %42, %9, %43 : vector<8x1xi1>, vector<8x1xi32>
    %c0_10 = arith.constant 0 : index
    %c0_11 = arith.constant 0 : index
    %45 = vector.load %arg3[%c0_10, %c0_11] : memref<8x1xi32, #tpu.memory_space<vmem>>, vector<8x1xi32>
    tpu.vector_store %arg3[%c0_10, %c0_11], %44 {strides = array<i32>} : memref<8x1xi32, #tpu.memory_space<vmem>>, vector<8x1xi32>,
    return
  }
  func.func @transform_0(%arg0: i32) -> (i32, i32) {
    %c0_i32 = arith.constant 0 : i32
    %c0_i32_0 = arith.constant 0 : i32
    return %arg0, %c0_i32 : i32, i32
  }
  func.func @transform_1(%arg0: i32) -> (i32, i32) {
    %c1_i32 = arith.constant 1 : i32
    %0 = arith.muli %arg0, %c1_i32 : i32
    %c1_i32_0 = arith.constant 1 : i32
    %1 = arith.subi %0, %c1_i32_0 : i32
    %c0_i32 = arith.constant 0 : i32
    %2 = arith.maxsi %1, %c0_i32 : i32
    %c0_i32_1 = arith.constant 0 : i32
    %c0_i32_2 = arith.constant 0 : i32
    return %2, %c0_i32_1 : i32, i32
  }
  func.func @transform_2(%arg0: i32) -> (i32, i32) {
    %c0_i32 = arith.constant 0 : i32
    %c0_i32_0 = arith.constant 0 : i32
    return %arg0, %c0_i32 : i32, i32
  }
}

</mosaic_0001>

<llo_original>
// kernel: greedy_ctc_device.1
$region0: #{greedy_ctc_device.1}
  #allocation0 [shape = 'u32[]', space=smem, size = 0x4, offset = 0x4, fixed_abs, tag = 'smem constant byte address 0x4 - core index']
  #allocation1 [shape = 'u32[72,128]{1,0:T(1,128)}', space=vmem, size = 0x9000, scoped, tag = 'internal scratch']
  %s0 = inlined_call_operand.hbm [shape: f32[8,32], index: 0, kind: input, shape index: {}, may-alias: {0,1}]
  %s1 = inlined_call_operand.hbm [shape: f32[8,32], index: 1, kind: input, shape index: {}, may-alias: {0,1}]
  %s2 = inlined_call_operand.vmem [shape: s32[8,1], index: 2, kind: output, shape index: {}]
  %s3 = sld [smem:[#allocation0]]
  $region26: #{greedy_ctc_device.1} parent=0
    _
  %s5 = ssub.s32 1, %s3
  %s6 = scalar_select 0, %s5, %s3
  $region1: #{greedy_ctc_device.1} parent=0
    #allocation2 [shape = 'u8[4096]{0}', space=vmem, size = 0x1000, scoped, tag = 'input window, operand 0, single buffered']
    #allocation3 [shape = 's32[1]{0}', space=sflag, size = 0x4, scoped, tag = 'scoped memory for greedy_ctc_device.1']
    #allocation4 [shape = 'u8[4096]{0}', space=vmem, size = 0x1000, scoped, tag = 'input window, operand 1, single buffered']
    #allocation5 [shape = 's32[1]{0}', space=sflag, size = 0x4, scoped, tag = 'scoped memory for greedy_ctc_device.1']
    %7 = vsyncpa [#allocation3], 0
    %8 = vsyncpa [#allocation5], 0
    // Predicated region
    $region2: #{greedy_ctc_device.1} parent=1 // pred_check
      _
    $region3: #{greedy_ctc_device.1} parent=1 // pred_check_branch
      %10 = sbr.rel (0) target = $region5
    $region4: #{greedy_ctc_device.1} parent=1 // pred_region
      %12 = vsyncadd [#allocation3], 0
      %s14 = sshll.u32 %s0, 4
      %s15 = int_to_ptr.hbm [resolvable:$true] %s14
      %s16 = sshll.u32 [#allocation2], 4
      %s17 = int_to_ptr.vmem [resolvable:$true] %s16
      %19 = dma.hbm_to_vmem [thread:$0]  %s15, 128, %s17, [#allocation3]
    $region5: #{greedy_ctc_device.1} parent=1 // pred_fallthru
      _
    // Predicated region
    $region6: #{greedy_ctc_device.1} parent=1 // pred_check
      _
    $region7: #{greedy_ctc_device.1} parent=1 // pred_check_branch
      %21 = sbr.rel (0) target = $region9
    $region8: #{greedy_ctc_device.1} parent=1 // pred_region
      %s22 = ssub.s32 0, 1
      %p23 = scmp.gt.s32.totalorder %s22, 0
      %s24 = scalar_select %p23, %s22, 0
      %26 = vsyncadd [#allocation5], 0
      %s27 = smul.addr %s24, 8
      %s28 = scalar_lea.hbm %s1, %s27
      %s30 = sshll.u32 %s28, 4
      %s31 = int_to_ptr.hbm [resolvable:$true] %s30
      %s32 = sshll.u32 [#allocation4], 4
      %s33 = int_to_ptr.vmem [resolvable:$true] %s32
      %35 = dma.hbm_to_vmem [thread:$0]  %s31, 128, %s33, [#allocation5]
    $region9: #{greedy_ctc_device.1} parent=1 // pred_fallthru
      _
    // Predicated region
    $region10: #{greedy_ctc_device.1} parent=1 // pred_check
      _
    $region11: #{greedy_ctc_device.1} parent=1 // pred_check_branch
      %37 = sbr.rel (0) target = $region13
    $region12: #{greedy_ctc_device.1} parent=1 // pred_region
      %39 = dma.done [#allocation3], 128
    $region13: #{greedy_ctc_device.1} parent=1 // pred_fallthru
      _
    // Predicated region
    $region14: #{greedy_ctc_device.1} parent=1 // pred_check
      _
    $region15: #{greedy_ctc_device.1} parent=1 // pred_check_branch
      %41 = sbr.rel (0) target = $region17
    $region16: #{greedy_ctc_device.1} parent=1 // pred_region
      %43 = dma.done [#allocation5], 128
    $region17: #{greedy_ctc_device.1} parent=1 // pred_fallthru
      _
    %s44 = ssub.s32 0, 1
    %p45 = scmp.gt.s32.totalorder %s44, 0
    %s46 = scalar_select %p45, %s44, 0
    %v47 = vld [vmem:[#allocation2] sm:$0xff]
    %vm48 = vcmask 261120
    %v49 = vsel %vm48, %v47, -inf
    %50 = vmax.xlane.f32.xlu0 %v49
    %v51 = vpop.xlane.xlu0 %50
    %v52 = vlaneseq
    %v53 = vand.u32 %v52, 127
    %vm54 = vcmp.eq.f32.partialorder %v47, %v51
    %v55 = vsel %vm54, %v53, 32
    %v56 = vsel %vm48, %v55, 2147483647
    %v57 = vand.u32 %v56, 65535
    %v58 = vshra.s32 %v56, 16
    %v59 = vcvt.s32.f32 %v57
    %v60 = vcvt.s32.f32 %v58
    %61 = vmin.xlane.f32.xlu0 %v60
    %v62 = vpop.xlane.xlu0 %61
    %vm63 = vcmp.eq.f32.partialorder %v60, %v62
    %v64 = vsel %vm63, %v59, inf
    %65 = vmin.xlane.f32.xlu0 %v64
    %v66 = vpop.xlane.xlu0 %65
    %v67 = vcvt.f32.s32 %v66
    %v68 = vcvt.f32.s32 %v62
    %v69 = vshll.u32 %v68, 16
    %v70 = vadd.s32 %v69, %v67
    %v71 = vld [vmem:[#allocation4 + $0x7] sm:$0x1]
    %vm72 = vcmask 253952
    %v73 = vsel %vm72, %v71, -inf
    %74 = vmax.xlane.f32.xlu0 %v73
    %v75 = vpop.xlane.xlu0 %74
    %vm76 = vcmp.eq.f32.partialorder %v71, %v75
    %v77 = vsel %vm76, %v53, 32
    %v78 = vsel %vm72, %v77, 2147483647
    %v79 = vand.u32 %v78, 65535
    %v80 = vshra.s32 %v78, 16
    %v81 = vcvt.s32.f32 %v79
    %v82 = vcvt.s32.f32 %v80
    %83 = vmin.xlane.f32.xlu0 %v82
    %v84 = vpop.xlane.xlu0 %83
    %vm85 = vcmp.eq.f32.partialorder %v82, %v84
    %v86 = vsel %vm85, %v81, inf
    %87 = vmin.xlane.f32.xlu0 %v86
    %v88 = vpop.xlane.xlu0 %87
    %v89 = vcvt.f32.s32 %v88
    %v90 = vcvt.f32.s32 %v84
    %v91 = vshll.u32 %v90, 16
    %v92 = vadd.s32 %v91, %v89
    %v93 = vrot.slane %v70, 7
    %v94 = vlaneseq
    %v95 = vshrl.u32 %v94, 7
    %vm96 = vcmp.eq.s32.totalorder %v95, 0
    %v97 = vperm.slane %v92, 0
    %v98 = vsel %vm96, %v97, %v93
    %p99 = scmp.eq.s32.totalorder 0, 0
    %vm100 = vcmp.ne.s32.totalorder %v70, %v98
    %s101 = scalar_select %p99, 1, 0
    %v102 = vstv %s101
    %vm103 = vcmp.eq.s32.totalorder %v102, 1
    %vm104 = vmand %vm96, %vm103
    %vm105 = vmor %vm100, %vm104
    %s106 = smul.u32 0, 8
    %v107 = vstv %s106
    %v108 = vadd.s32 %v107, %v95
    %vm109 = vcmp.ne.s32.totalorder %v70, 0
    %vm110 = vmand %vm105, %vm109
    %vm111 = vcmp.lt.s32.totalorder %v108, 8
    %vm112 = vmand %vm110, %vm111
    %v113 = vsel %vm112, %v70, 4294967295
    %vm114 = vcmask 7168
    %115 = vst.msk [vmem:[%s2] sm:$0xff] %vm114, %v113
    // Predicated region
    $region18: #{greedy_ctc_device.1} parent=1 // pred_check
      _
    $region19: #{greedy_ctc_device.1} parent=1 // pred_check_branch
      %117 = sbr.rel (0) target = $region21
    $region20: #{greedy_ctc_device.1} parent=1 // pred_region
      _
    $region21: #{greedy_ctc_device.1} parent=1 // pred_fallthru
      _
    // Predicated region
    $region22: #{greedy_ctc_device.1} parent=1 // pred_check
      _
    $region23: #{greedy_ctc_device.1} parent=1 // pred_check_branch
      %119 = sbr.rel (0) target = $region25
    $region24: #{greedy_ctc_device.1} parent=1 // pred_region
      _
    $region25: #{greedy_ctc_device.1} parent=1 // pred_fallthru
      _
    %120 = vsyncpa [#allocation3], 1
    %121 = vsyncpa [#allocation5], 1

</llo_original>
